<compile_context>
chip_gen: v7x
topology: tpu7x:2x2x1
jax: 0.10.0
libtpu: 0.0.40
codegen_flags: <defaults>
</compile_context>

<pallas_src>
import jax
import jax.numpy as jnp
from jax.experimental import pallas as pl
from jax.experimental.pallas import tpu as pltpu


def _round_up(n, m):
    return ((n + m - 1) // m) * m


def _critic_kernel(x_ref,
                   w14_ref, b14_ref,
                   w2_ref, b2_ref,
                   w5_ref, b5_ref,
                   w36_ref, b36_ref,
                   o_ref):
    """Fused twin-Q MLP on one batch tile.

    x_ref   : (TB, D)   compute dtype (bf16 by default)
    w14_ref : (D, 2H)   fused fc1 | fc4 weights
    w2_ref  : (H, H), w5_ref : (H, H)
    w36_ref : (2H, 2)   block-diagonal [w3 0; 0 w6]
    o_ref   : (TB, 2)   f32; column 0 = q1, column 1 = q2
    """
    H = w2_ref.shape[0]
    cdt = w14_ref.dtype

    x = x_ref[...]

    # layer 1: both heads in a single MXU launch, f32 accumulation
    h = jnp.dot(x, w14_ref[...], preferred_element_type=jnp.float32) + b14_ref[...]
    h = jnp.maximum(h, 0.0).astype(cdt)          # (TB, 2H)

    # layer 2: the two hidden paths stay separate (exact FLOPs)
    h1 = jnp.dot(h[:, :H], w2_ref[...], preferred_element_type=jnp.float32) + b2_ref[...]
    h2 = jnp.dot(h[:, H:], w5_ref[...], preferred_element_type=jnp.float32) + b5_ref[...]
    h1 = jnp.maximum(h1, 0.0).astype(cdt)
    h2 = jnp.maximum(h2, 0.0).astype(cdt)

    # layer 3: both heads in one narrow matmul (N=2 instead of two N=1 drains)
    hcat = jnp.concatenate([h1, h2], axis=-1)    # (TB, 2H)
    o = jnp.dot(hcat, w36_ref[...], preferred_element_type=jnp.float32) + b36_ref[...]
    o_ref[...] = o.astype(o_ref.dtype)


def critic_forward(obs, action, params, *, tile_b=None,
                   compute_dtype=jnp.bfloat16):
    """Twin-Q critic forward. obs: (B, obs_dim), action: (B, action_dim).
    Returns (q1, q2), each (B, 1) float32."""
    x = jnp.concatenate([obs, action], axis=-1)
    B, D = x.shape
    H = params["w1"].shape[1]
    cdt = compute_dtype

    # ---- one-time weight fusion / packing (folds into the jitted graph) ----
    w14 = jnp.concatenate([params["w1"], params["w4"]], axis=1).astype(cdt)   # (D, 2H)
    b14 = jnp.concatenate([params["b1"], params["b4"]], axis=1).astype(jnp.float32)
    w2 = params["w2"].astype(cdt)
    b2 = params["b2"].astype(jnp.float32)
    w5 = params["w5"].astype(cdt)
    b5 = params["b5"].astype(jnp.float32)
    w36 = jnp.concatenate(
        [jnp.concatenate([params["w3"], jnp.zeros_like(params["w3"])], axis=1),
         jnp.concatenate([jnp.zeros_like(params["w6"]), params["w6"]], axis=1)],
        axis=0).astype(cdt)                                                   # (2H, 2)
    b36 = jnp.concatenate([params["b3"], params["b6"]], axis=1).astype(jnp.float32)

    # ---- batch tiling: MXU-friendly M, pad ragged batches ----
    if tile_b is None:
        tile_b = 256 if B >= 256 else _round_up(B, 16)
    B_pad = _round_up(B, tile_b)

    x = x.astype(cdt)
    if B_pad != B:
        x = jnp.pad(x, ((0, B_pad - B), (0, 0)))

    weight_args = (w14, b14, w2, b2, w5, b5, w36, b36)

    def rep_spec(arr):
        # whole-array block, constant index map -> fetched once, reused per step
        return pl.BlockSpec(arr.shape, lambda i: (0,) * arr.ndim)

    out = pl.pallas_call(
        _critic_kernel,
        grid=(B_pad // tile_b,),
        in_specs=[pl.BlockSpec((tile_b, D), lambda i: (i, 0))]
                 + [rep_spec(a) for a in weight_args],
        out_specs=pl.BlockSpec((tile_b, 2), lambda i: (i, 0)),
        out_shape=jax.ShapeDtypeStruct((B_pad, 2), jnp.float32),
        compiler_params=pltpu.CompilerParams(
            dimension_semantics=("parallel",)),
    )(x, *weight_args)

    out = out[:B]
    return out[:, 0:1], out[:, 1:2]


def init_critic_params(key, obs_dim, action_dim, hidden=256):
    """Deterministic init mimicking nn.Linear's U(-1/sqrt(fan_in), 1/sqrt(fan_in)).
    Weights stored as (in_features, out_features)."""
    d = obs_dim + action_dim
    dims = [(d, hidden), (hidden, hidden), (hidden, 1),
            (d, hidden), (hidden, hidden), (hidden, 1)]
    params = {}
    keys = jax.random.split(key, 2 * len(dims))
    for idx, (fan_in, fan_out) in enumerate(dims):
        bound = 1.0 / jnp.sqrt(float(fan_in))
        w = jax.random.uniform(keys[2 * idx], (fan_in, fan_out),
                               minval=-bound, maxval=bound, dtype=jnp.float32)
        b = jax.random.uniform(keys[2 * idx + 1], (1, fan_out),
                               minval=-bound, maxval=bound, dtype=jnp.float32)
        params[f"w{idx + 1}"] = w
        params[f"b{idx + 1}"] = b
    return params


def _reference_forward(obs, action, params, compute_dtype=jnp.float32):
    """Plain-JAX reference, optionally casting matmul inputs like the kernel."""
    cdt = compute_dtype

    def lin(h, w, b):
        return jnp.dot(h.astype(cdt), w.astype(cdt),
                       preferred_element_type=jnp.float32) + b

    x = jnp.concatenate([obs, action], axis=-1)
    h = jax.nn.relu(lin(x, params["w1"], params["b1"]))
    h = jax.nn.relu(lin(h, params["w2"], params["b2"]))
    q1 = lin(h, params["w3"], params["b3"])
    g = jax.nn.relu(lin(x, params["w4"], params["b4"]))
    g = jax.nn.relu(lin(g, params["w5"], params["b5"]))
    q2 = lin(g, params["w6"], params["b6"])
    return q1, q2


if __name__ == "__main__":
    obs_dim, action_dim = 16, 8
    batch = 8

    key = jax.random.PRNGKey(0)
    k_obs, k_act, k_params, k_obs2, k_act2 = jax.random.split(key, 5)

    params = init_critic_params(k_params, obs_dim, action_dim)
    fwd = jax.jit(critic_forward)

    # --- small batch (single padded block, grid = 1) ---
    obs = jax.random.normal(k_obs, (batch, obs_dim), dtype=jnp.float32)
    action = jax.random.normal(k_act, (batch, action_dim), dtype=jnp.float32)
    q1, q2 = fwd(obs, action, params)
    jax.block_until_ready((q1, q2))
    assert q1.shape == (batch, 1) and q2.shape == (batch, 1)

    # matched-precision (bf16-input) reference: should agree tightly
    r1, r2 = _reference_forward(obs, action, params, compute_dtype=jnp.bfloat16)
    assert jnp.allclose(q1, r1, atol=2e-3), "q1 mismatch vs bf16 reference"
    assert jnp.allclose(q2, r2, atol=2e-3), "q2 mismatch vs bf16 reference"

    # full-f32 reference: loose tolerance (bf16 matmul inputs)
    f1, f2 = _reference_forward(obs, action, params, compute_dtype=jnp.float32)
    assert jnp.allclose(q1, f1, atol=5e-2, rtol=5e-2), "q1 drift vs f32 reference"
    assert jnp.allclose(q2, f2, atol=5e-2, rtol=5e-2), "q2 drift vs f32 reference"

    # --- larger, ragged batch (exercises padding + multi-step parallel grid) ---
    big_b = 300
    obs_b = jax.random.normal(k_obs2, (big_b, obs_dim), dtype=jnp.float32)
    act_b = jax.random.normal(k_act2, (big_b, action_dim), dtype=jnp.float32)
    p1, p2 = fwd(obs_b, act_b, params)
    jax.block_until_ready((p1, p2))
    rr1, rr2 = _reference_forward(obs_b, act_b, params, compute_dtype=jnp.bfloat16)
    assert p1.shape == (big_b, 1) and p2.shape == (big_b, 1)
    assert jnp.allclose(p1, rr1, atol=2e-3), "q1 mismatch (big batch)"
    assert jnp.allclose(p2, rr2, atol=2e-3), "q2 mismatch (big batch)"

    print("KERNEL_OK")
</pallas_src>

<mosaic_0001>
module attributes {stable_mosaic.version = 11 : i64} {
  func.func @_critic_kernel(%arg0: i32, %arg1: memref<16x24xbf16, #tpu.memory_space<vmem>>, %arg2: memref<24x512xbf16, #tpu.memory_space<vmem>>, %arg3: memref<1x512xf32, #tpu.memory_space<vmem>>, %arg4: memref<256x256xbf16, #tpu.memory_space<vmem>>, %arg5: memref<1x256xf32, #tpu.memory_space<vmem>>, %arg6: memref<256x256xbf16, #tpu.memory_space<vmem>>, %arg7: memref<1x256xf32, #tpu.memory_space<vmem>>, %arg8: memref<512x2xbf16, #tpu.memory_space<vmem>>, %arg9: memref<1x2xf32, #tpu.memory_space<vmem>>, %arg10: memref<16x2xf32, #tpu.memory_space<vmem>>) attributes {dimension_semantics = [#tpu.dimension_semantics<parallel>], iteration_bounds = array<i64: 1>, scalar_prefetch = 0 : i64, scratch_operands = 0 : i64, tpu.core_type = #tpu.core_type<tc>, window_params = [{transform_indices = @transform_0, window_bounds = array<i64: 16, 24>}, {pipeline_mode = #tpu.pipeline_mode<synchronous>, transform_indices = @transform_1, window_bounds = array<i64: 24, 512>}, {pipeline_mode = #tpu.pipeline_mode<synchronous>, transform_indices = @transform_2, window_bounds = array<i64: 1, 512>}, {pipeline_mode = #tpu.pipeline_mode<synchronous>, transform_indices = @transform_3, window_bounds = array<i64: 256, 256>}, {pipeline_mode = #tpu.pipeline_mode<synchronous>, transform_indices = @transform_4, window_bounds = array<i64: 1, 256>}, {pipeline_mode = #tpu.pipeline_mode<synchronous>, transform_indices = @transform_5, window_bounds = array<i64: 256, 256>}, {pipeline_mode = #tpu.pipeline_mode<synchronous>, transform_indices = @transform_6, window_bounds = array<i64: 1, 256>}, {pipeline_mode = #tpu.pipeline_mode<synchronous>, transform_indices = @transform_7, window_bounds = array<i64: 512, 2>}, {pipeline_mode = #tpu.pipeline_mode<synchronous>, transform_indices = @transform_8, window_bounds = array<i64: 1, 2>}, {transform_indices = @transform_9, window_bounds = array<i64: 16, 2>}]} {
    %c0 = arith.constant 0 : index
    %c0_0 = arith.constant 0 : index
    %0 = vector.load %arg1[%c0, %c0_0] : memref<16x24xbf16, #tpu.memory_space<vmem>>, vector<16x24xbf16>
    %c0_1 = arith.constant 0 : index
    %c0_2 = arith.constant 0 : index
    %1 = vector.load %arg2[%c0_1, %c0_2] : memref<24x512xbf16, #tpu.memory_space<vmem>>, vector<24x512xbf16>
    %cst = arith.constant dense<0.000000e+00> : vector<16x512xf32>
    %2 = tpu.matmul %0, %1, %cst {dimension_numbers = #tpu.dot_dimension_numbers<[1], [0], [0], [1], [0, 0, 1, 1], [], []>} : vector<16x24xbf16>, vector<24x512xbf16>, vector<16x512xf32> -> vector<16x512xf32>
    %c0_3 = arith.constant 0 : index
    %c0_4 = arith.constant 0 : index
    %3 = vector.load %arg3[%c0_3, %c0_4] : memref<1x512xf32, #tpu.memory_space<vmem>>, vector<1x512xf32>
    %4 = vector.broadcast %3 : vector<1x512xf32> to vector<16x512xf32>
    %5 = arith.addf %2, %4 : vector<16x512xf32>
    %cst_5 = arith.constant 0.000000e+00 : f32
    %6 = vector.broadcast %cst_5 : f32 to vector<16x512xf32>
    %7 = arith.maximumf %5, %6 : vector<16x512xf32>
    %8 = arith.truncf %7 : vector<16x512xf32> to vector<16x512xbf16>
    %9 = vector.extract_strided_slice %8 {offsets = [0, 0], sizes = [16, 256], strides = [1, 1]} : vector<16x512xbf16> to vector<16x256xbf16>
    %c0_6 = arith.constant 0 : index
    %c0_7 = arith.constant 0 : index
    %10 = vector.load %arg4[%c0_6, %c0_7] : memref<256x256xbf16, #tpu.memory_space<vmem>>, vector<256x256xbf16>
    %cst_8 = arith.constant dense<0.000000e+00> : vector<16x256xf32>
    %11 = tpu.matmul %9, %10, %cst_8 {dimension_numbers = #tpu.dot_dimension_numbers<[1], [0], [0], [1], [0, 0, 1, 1], [], []>} : vector<16x256xbf16>, vector<256x256xbf16>, vector<16x256xf32> -> vector<16x256xf32>
    %c0_9 = arith.constant 0 : index
    %c0_10 = arith.constant 0 : index
    %12 = vector.load %arg5[%c0_9, %c0_10] : memref<1x256xf32, #tpu.memory_space<vmem>>, vector<1x256xf32>
    %13 = vector.broadcast %12 : vector<1x256xf32> to vector<16x256xf32>
    %14 = arith.addf %11, %13 : vector<16x256xf32>
    %15 = vector.extract_strided_slice %8 {offsets = [0, 256], sizes = [16, 256], strides = [1, 1]} : vector<16x512xbf16> to vector<16x256xbf16>
    %c0_11 = arith.constant 0 : index
    %c0_12 = arith.constant 0 : index
    %16 = vector.load %arg6[%c0_11, %c0_12] : memref<256x256xbf16, #tpu.memory_space<vmem>>, vector<256x256xbf16>
    %cst_13 = arith.constant dense<0.000000e+00> : vector<16x256xf32>
    %17 = tpu.matmul %15, %16, %cst_13 {dimension_numbers = #tpu.dot_dimension_numbers<[1], [0], [0], [1], [0, 0, 1, 1], [], []>} : vector<16x256xbf16>, vector<256x256xbf16>, vector<16x256xf32> -> vector<16x256xf32>
    %c0_14 = arith.constant 0 : index
    %c0_15 = arith.constant 0 : index
    %18 = vector.load %arg7[%c0_14, %c0_15] : memref<1x256xf32, #tpu.memory_space<vmem>>, vector<1x256xf32>
    %19 = vector.broadcast %18 : vector<1x256xf32> to vector<16x256xf32>
    %20 = arith.addf %17, %19 : vector<16x256xf32>
    %cst_16 = arith.constant 0.000000e+00 : f32
    %21 = vector.broadcast %cst_16 : f32 to vector<16x256xf32>
    %22 = arith.maximumf %14, %21 : vector<16x256xf32>
    %23 = arith.truncf %22 : vector<16x256xf32> to vector<16x256xbf16>
    %cst_17 = arith.constant 0.000000e+00 : f32
    %24 = vector.broadcast %cst_17 : f32 to vector<16x256xf32>
    %25 = arith.maximumf %20, %24 : vector<16x256xf32>
    %26 = arith.truncf %25 : vector<16x256xf32> to vector<16x256xbf16>
    %27 = tpu.concatenate %23, %26 in 1 : vector<16x256xbf16>, vector<16x256xbf16> -> vector<16x512xbf16>
    %c0_18 = arith.constant 0 : index
    %c0_19 = arith.constant 0 : index
    %28 = vector.load %arg8[%c0_18, %c0_19] : memref<512x2xbf16, #tpu.memory_space<vmem>>, vector<512x2xbf16>
    %cst_20 = arith.constant dense<0.000000e+00> : vector<16x2xf32>
    %29 = tpu.matmul %27, %28, %cst_20 {dimension_numbers = #tpu.dot_dimension_numbers<[1], [0], [0], [1], [0, 0, 1, 1], [], []>} : vector<16x512xbf16>, vector<512x2xbf16>, vector<16x2xf32> -> vector<16x2xf32>
    %c0_21 = arith.constant 0 : index
    %c0_22 = arith.constant 0 : index
    %30 = vector.load %arg9[%c0_21, %c0_22] : memref<1x2xf32, #tpu.memory_space<vmem>>, vector<1x2xf32>
    %31 = vector.broadcast %30 : vector<1x2xf32> to vector<16x2xf32>
    %32 = arith.addf %29, %31 : vector<16x2xf32>
    %c0_23 = arith.constant 0 : index
    %c0_24 = arith.constant 0 : index
    %33 = vector.load %arg10[%c0_23, %c0_24] : memref<16x2xf32, #tpu.memory_space<vmem>>, vector<16x2xf32>
    tpu.vector_store %arg10[%c0_23, %c0_24], %32 {strides = array<i32>} : memref<16x2xf32, #tpu.memory_space<vmem>>, vector<16x2xf32>,
    return
  }
  func.func @transform_0(%arg0: i32) -> (i32, i32) {
    %c0_i32 = arith.constant 0 : i32
    %c0_i32_0 = arith.constant 0 : i32
    return %arg0, %c0_i32 : i32, i32
  }
  func.func @transform_1(%arg0: i32) -> (i32, i32) {
    %c0_i32 = arith.constant 0 : i32
    %c0_i32_0 = arith.constant 0 : i32
    %c0_i32_1 = arith.constant 0 : i32
    return %c0_i32, %c0_i32_0 : i32, i32
  }
  func.func @transform_2(%arg0: i32) -> (i32, i32) {
    %c0_i32 = arith.constant 0 : i32
    %c0_i32_0 = arith.constant 0 : i32
    %c0_i32_1 = arith.constant 0 : i32
    return %c0_i32, %c0_i32_0 : i32, i32
  }
  func.func @transform_3(%arg0: i32) -> (i32, i32) {
    %c0_i32 = arith.constant 0 : i32
    %c0_i32_0 = arith.constant 0 : i32
    %c0_i32_1 = arith.constant 0 : i32
    return %c0_i32, %c0_i32_0 : i32, i32
  }
  func.func @transform_4(%arg0: i32) -> (i32, i32) {
    %c0_i32 = arith.constant 0 : i32
    %c0_i32_0 = arith.constant 0 : i32
    %c0_i32_1 = arith.constant 0 : i32
    return %c0_i32, %c0_i32_0 : i32, i32
  }
  func.func @transform_5(%arg0: i32) -> (i32, i32) {
    %c0_i32 = arith.constant 0 : i32
    %c0_i32_0 = arith.constant 0 : i32
    %c0_i32_1 = arith.constant 0 : i32
    return %c0_i32, %c0_i32_0 : i32, i32
  }
  func.func @transform_6(%arg0: i32) -> (i32, i32) {
    %c0_i32 = arith.constant 0 : i32
    %c0_i32_0 = arith.constant 0 : i32
    %c0_i32_1 = arith.constant 0 : i32
    return %c0_i32, %c0_i32_0 : i32, i32
  }
  func.func @transform_7(%arg0: i32) -> (i32, i32) {
    %c0_i32 = arith.constant 0 : i32
    %c0_i32_0 = arith.constant 0 : i32
    %c0_i32_1 = arith.constant 0 : i32
    return %c0_i32, %c0_i32_0 : i32, i32
  }
  func.func @transform_8(%arg0: i32) -> (i32, i32) {
    %c0_i32 = arith.constant 0 : i32
    %c0_i32_0 = arith.constant 0 : i32
    %c0_i32_1 = arith.constant 0 : i32
    return %c0_i32, %c0_i32_0 : i32, i32
  }
  func.func @transform_9(%arg0: i32) -> (i32, i32) {
    %c0_i32 = arith.constant 0 : i32
    %c0_i32_0 = arith.constant 0 : i32
    return %arg0, %c0_i32 : i32, i32
  }
}

</mosaic_0001>

<llo_original>
// kernel: critic_forward.1
$region0: #{critic_forward.1}
  #allocation0 [shape = 'u32[]', space=smem, size = 0x4, offset = 0x4, fixed_abs, tag = 'smem constant byte address 0x4 - core index']
  #allocation1 [shape = 'u32[144,128]{1,0:T(1,128)}', space=vmem, size = 0x12000, scoped, tag = 'internal scratch']
  %s0 = inlined_call_operand.vmem [shape: bf16[16,24], index: 0, kind: input, shape index: {}]
  %s1 = inlined_call_operand.vmem [shape: bf16[24,512], index: 1, kind: input, shape index: {}]
  %s2 = inlined_call_operand.vmem [shape: f32[1,512], index: 2, kind: input, shape index: {}]
  %s3 = inlined_call_operand.vmem [shape: bf16[256,256], index: 3, kind: input, shape index: {}]
  %s4 = inlined_call_operand.vmem [shape: f32[1,256], index: 4, kind: input, shape index: {}]
  %s5 = inlined_call_operand.vmem [shape: bf16[256,256], index: 5, kind: input, shape index: {}]
  %s6 = inlined_call_operand.vmem [shape: f32[1,256], index: 6, kind: input, shape index: {}]
  %s7 = inlined_call_operand.vmem [shape: bf16[512,2], index: 7, kind: input, shape index: {}]
  %s8 = inlined_call_operand.vmem [shape: f32[1,2], index: 8, kind: input, shape index: {}]
  %s9 = inlined_call_operand.vmem [shape: f32[16,2], index: 9, kind: output, shape index: {}]
  %s10 = sld [smem:[#allocation0]]
  $region46: #{critic_forward.1} parent=0
    _
  %s12 = ssub.s32 1, %s10
  %s13 = scalar_select 0, %s12, %s10
  // Predicated region
  $region2: #{critic_forward.1} parent=0 // pred_check
    _
  $region3: #{critic_forward.1} parent=0 // pred_check_branch
    %15 = sbr.rel (0) target = $region5
  $region4: #{critic_forward.1} parent=0 // pred_region
    _
  $region5: #{critic_forward.1} parent=0 // pred_fallthru
    _
  // Predicated region
  $region6: #{critic_forward.1} parent=0 // pred_check
    _
  $region7: #{critic_forward.1} parent=0 // pred_check_branch
    %17 = sbr.rel (0) target = $region9
  $region8: #{critic_forward.1} parent=0 // pred_region
    _
  $region9: #{critic_forward.1} parent=0 // pred_fallthru
    _
  // Predicated region
  $region10: #{critic_forward.1} parent=0 // pred_check
    _
  $region11: #{critic_forward.1} parent=0 // pred_check_branch
    %19 = sbr.rel (0) target = $region13
  $region12: #{critic_forward.1} parent=0 // pred_region
    _
  $region13: #{critic_forward.1} parent=0 // pred_fallthru
    _
  // Predicated region
  $region14: #{critic_forward.1} parent=0 // pred_check
    _
  $region15: #{critic_forward.1} parent=0 // pred_check_branch
    %21 = sbr.rel (0) target = $region17
  $region16: #{critic_forward.1} parent=0 // pred_region
    _
  $region17: #{critic_forward.1} parent=0 // pred_fallthru
    _
  // Predicated region
  $region18: #{critic_forward.1} parent=0 // pred_check
    _
  $region19: #{critic_forward.1} parent=0 // pred_check_branch
    %23 = sbr.rel (0) target = $region21
  $region20: #{critic_forward.1} parent=0 // pred_region
    _
  $region21: #{critic_forward.1} parent=0 // pred_fallthru
    _
  // Predicated region
  $region22: #{critic_forward.1} parent=0 // pred_check
    _
  $region23: #{critic_forward.1} parent=0 // pred_check_branch
    %25 = sbr.rel (0) target = $region25
  $region24: #{critic_forward.1} parent=0 // pred_region
    _
  $region25: #{critic_forward.1} parent=0 // pred_fallthru
    _
  // Predicated region
  $region26: #{critic_forward.1} parent=0 // pred_check
    _
  $region27: #{critic_forward.1} parent=0 // pred_check_branch
    %27 = sbr.rel (0) target = $region29
  $region28: #{critic_forward.1} parent=0 // pred_region
    _
  $region29: #{critic_forward.1} parent=0 // pred_fallthru
    _
  // Predicated region
  $region30: #{critic_forward.1} parent=0 // pred_check
    _
  $region31: #{critic_forward.1} parent=0 // pred_check_branch
    %29 = sbr.rel (0) target = $region33
  $region32: #{critic_forward.1} parent=0 // pred_region
    _
  $region33: #{critic_forward.1} parent=0 // pred_fallthru
    _
  // Predicated region
  $region34: #{critic_forward.1} parent=0 // pred_check
    _
  $region35: #{critic_forward.1} parent=0 // pred_check_branch
    %31 = sbr.rel (0) target = $region37
  $region36: #{critic_forward.1} parent=0 // pred_region
    _
  $region37: #{critic_forward.1} parent=0 // pred_fallthru
    _
  %v33 = vld [vmem:[%s0] sm:$0xf]
  %v34 = vld [vmem:[%s0 + $0x4] sm:$0xf]
  %v35 = vld [vmem:[%s1] sm:$0xff]
  %v36 = vld [vmem:[%s1 + $0x8] sm:$0xff]
  %v37 = vld [vmem:[%s1 + $0x10] sm:$0xff]
  %v38 = vld [vmem:[%s1 + $0x18] sm:$0xff]
  %v39 = vld [vmem:[%s1 + $0x20] sm:$0xff]
  %v40 = vld [vmem:[%s1 + $0x28] sm:$0xff]
  %v41 = vld [vmem:[%s2] sm:$0xf]
  %v43 = vlaneseq
  %v44 = vshrl.u32 %v43, 7
  %v45 = vsub.s32 0, %v44
  %v46 = vrot.slane %v41, %v45
  %v47 = vlaneseq
  %v48 = vshrl.u32 %v47, 7
  %v49 = vsub.s32 1, %v48
  %v50 = vrot.slane %v41, %v49
  %v51 = vlaneseq
  %v52 = vshrl.u32 %v51, 7
  %v53 = vsub.s32 2, %v52
  %v54 = vrot.slane %v41, %v53
  %v55 = vlaneseq
  %v56 = vshrl.u32 %v55, 7
  %v57 = vsub.s32 3, %v56
  %v58 = vrot.slane %v41, %v57
  %v65 = vunpack.c.l.b16 %v33
  %v66 = vunpack.c.l.b16 %v34
  %v67 = vpack.c.b16 %v66, %v65
  %v74 = vunpack.c.l.b16 %v35
  %v75 = vunpack.c.h.b16 %v35
  %v76 = vunpack.c.l.b16 %v36
  %v77 = vunpack.c.h.b16 %v36
  %v78 = vunpack.c.l.b16 %v37
  %v79 = vunpack.c.h.b16 %v37
  %v80 = vunpack.c.l.b16 %v38
  %v81 = vunpack.c.h.b16 %v38
  %v82 = vunpack.c.l.b16 %v39
  %v83 = vunpack.c.h.b16 %v39
  %v84 = vunpack.c.l.b16 %v40
  %v85 = vunpack.c.h.b16 %v40
  %v86 = vpack.c.b16 %v78, %v74
  %v87 = vpack.c.b16 %v79, %v75
  %v88 = vpack.c.b16 %v80, %v76
  %v89 = vpack.c.b16 %v81, %v77
  %v90 = vpack.c.b16 %v82, %v82
  %v91 = vpack.c.b16 %v83, %v83
  %v92 = vpack.c.b16 %v84, %v84
  %v93 = vpack.c.b16 %v85, %v85
  %vm98 = vcmask 195584
  %v100 = vsel %vm98, %v67, 0
  %vm102 = vcmask 1043456
  %v104 = vsel %vm102, %v90, 0
  %v107 = vsel %vm102, %v91, 0
  %v110 = vsel %vm102, %v92, 0
  %v113 = vsel %vm102, %v93, 0
  %115 = vmatprep.subr.bf16.mxu0 %v87
  %116 = vmatpush1.bf16.msra.mxu0 %v86
  %117 = vmatprep.subr.bf16.mxu0 %v107
  %118 = vmatpush1.bf16.msra.mxu0 %v104
  %119 = vmatprep.subr.bf16.mxu0 0
  %120 = vmatpush1.bf16.msra.mxu0 0
  %121 = vmatprep.subr.bf16.mxu0 0
  %122 = vmatpush1.bf16.msra.mxu0 0
  %123 = vmatprep.subr.bf16.mxu0 0
  %124 = vmatpush1.bf16.msra.mxu0 0
  %125 = vmatprep.subr.bf16.mxu0 0
  %126 = vmatpush1.bf16.msra.mxu0 0
  %127 = vmatprep.subr.bf16.mxu0 0
  %128 = vmatpush1.bf16.msra.mxu0 0
  %129 = vmatprep.subr.bf16.mxu0 0
  %130 = vmatpush1.bf16.msra.mxu0 0
  %131 = vmatprep.subr.bf16.mxu0 0
  %132 = vmatpush1.bf16.msra.mxu0 0
  %133 = vmatprep.subr.bf16.mxu0 0
  %134 = vmatpush1.bf16.msra.mxu0 0
  %135 = vmatprep.subr.bf16.mxu0 0
  %136 = vmatpush1.bf16.msra.mxu0 0
  %137 = vmatprep.subr.bf16.mxu0 0
  %138 = vmatpush1.bf16.msra.mxu0 0
  %139 = vmatprep.subr.bf16.mxu0 0
  %140 = vmatpush1.bf16.msra.mxu0 0
  %141 = vmatprep.subr.bf16.mxu0 0
  %142 = vmatpush1.bf16.msra.mxu0 0
  %143 = vmatprep.subr.bf16.mxu0 0
  %144 = vmatpush1.bf16.msra.mxu0 0
  %145 = vmatprep.subr.bf16.mxu0 0
  %146 = vmatpush1.bf16.msra.mxu0 0
  %147 = vmatprep.mubr.bf16.mxu0 0
  %148 = vmatmul.mubr.bf16.gmra.mrb[0].mxu0 %v100
  %v149 = vpop.f32.mrb[0].mxu0
  %v150 = vadd.f32 %v46, %v149
  %v151 = vpop.f32.mrb[0].mxu0
  %v152 = vadd.f32 %v50, %v151
  %v153 = vpop.f32.mrb[0].mxu0
  %v154 = vadd.f32 %v46, %v153
  %v155 = vpop.f32.mrb[0].mxu0
  %v156 = vadd.f32 %v50, %v155
  %157 = vdwg.mxu0
  %158 = vmatprep.subr.bf16.mxu0 %v89
  %159 = vmatpush1.bf16.msra.mxu0 %v88
  %160 = vmatprep.subr.bf16.mxu0 %v113
  %161 = vmatpush1.bf16.msra.mxu0 %v110
  %162 = vmatprep.subr.bf16.mxu0 0
  %163 = vmatpush1.bf16.msra.mxu0 0
  %164 = vmatprep.subr.bf16.mxu0 0
  %165 = vmatpush1.bf16.msra.mxu0 0
  %166 = vmatprep.subr.bf16.mxu0 0
  %167 = vmatpush1.bf16.msra.mxu0 0
  %168 = vmatprep.subr.bf16.mxu0 0
  %169 = vmatpush1.bf16.msra.mxu0 0
  %170 = vmatprep.subr.bf16.mxu0 0
  %171 = vmatpush1.bf16.msra.mxu0 0
  %172 = vmatprep.subr.bf16.mxu0 0
  %173 = vmatpush1.bf16.msra.mxu0 0
  %174 = vmatprep.subr.bf16.mxu0 0
  %175 = vmatpush1.bf16.msra.mxu0 0
  %176 = vmatprep.subr.bf16.mxu0 0
  %177 = vmatpush1.bf16.msra.mxu0 0
  %178 = vmatprep.subr.bf16.mxu0 0
  %179 = vmatpush1.bf16.msra.mxu0 0
  %180 = vmatprep.subr.bf16.mxu0 0
  %181 = vmatpush1.bf16.msra.mxu0 0
  %182 = vmatprep.subr.bf16.mxu0 0
  %183 = vmatpush1.bf16.msra.mxu0 0
  %184 = vmatprep.subr.bf16.mxu0 0
  %185 = vmatpush1.bf16.msra.mxu0 0
  %186 = vmatprep.subr.bf16.mxu0 0
  %187 = vmatpush1.bf16.msra.mxu0 0
  %188 = vmatprep.subr.bf16.mxu0 0
  %189 = vmatpush1.bf16.msra.mxu0 0
  %190 = vmatprep.mubr.bf16.mxu0 0
  %191 = vmatmul.mubr.bf16.gmra.mrb[0].mxu0 %v100
  %v192 = vpop.f32.mrb[0].mxu0
  %v193 = vadd.f32 %v54, %v192
  %v194 = vpop.f32.mrb[0].mxu0
  %v195 = vadd.f32 %v58, %v194
  %v196 = vpop.f32.mrb[0].mxu0
  %v197 = vadd.f32 %v54, %v196
  %v198 = vpop.f32.mrb[0].mxu0
  %v199 = vadd.f32 %v58, %v198
  %200 = vdwg.mxu0
  %v201 = vmax.f32 %v150, 0.0
  %v202 = vmax.f32 %v152, 0.0
  %v203 = vmax.f32 %v193, 0.0
  %v204 = vmax.f32 %v195, 0.0
  %v205 = vmax.f32 %v154, 0.0
  %v206 = vmax.f32 %v156, 0.0
  %v207 = vmax.f32 %v197, 0.0
  %v208 = vmax.f32 %v199, 0.0
  %v209 = vpack.c.bf16 %v205, %v201
  %v210 = vpack.c.bf16 %v206, %v202
  %v211 = vpack.c.bf16 %v207, %v203
  %v212 = vpack.c.bf16 %v208, %v204
  %v213 = vld [vmem:[%s3] sm:$0xff]
  %v214 = vld [vmem:[%s3 + $0x8] sm:$0xff]
  %v215 = vld [vmem:[%s3 + $0x10] sm:$0xff]
  %v216 = vld [vmem:[%s3 + $0x18] sm:$0xff]
  %v217 = vld [vmem:[%s3 + $0x20] sm:$0xff]
  %v218 = vld [vmem:[%s3 + $0x28] sm:$0xff]
  %v219 = vld [vmem:[%s3 + $0x30] sm:$0xff]
  %v220 = vld [vmem:[%s3 + $0x38] sm:$0xff]
  %v221 = vld [vmem:[%s3 + $0x40] sm:$0xff]
  %v222 = vld [vmem:[%s3 + $0x48] sm:$0xff]
  %v223 = vld [vmem:[%s3 + $0x50] sm:$0xff]
  %v224 = vld [vmem:[%s3 + $0x58] sm:$0xff]
  %v225 = vld [vmem:[%s3 + $0x60] sm:$0xff]
  %v226 = vld [vmem:[%s3 + $0x68] sm:$0xff]
  %v227 = vld [vmem:[%s3 + $0x70] sm:$0xff]
  %v228 = vld [vmem:[%s3 + $0x78] sm:$0xff]
  %v229 = vld [vmem:[%s3 + $0x80] sm:$0xff]
  %v230 = vld [vmem:[%s3 + $0x88] sm:$0xff]
  %v231 = vld [vmem:[%s3 + $0x90] sm:$0xff]
  %v232 = vld [vmem:[%s3 + $0x98] sm:$0xff]
  %v233 = vld [vmem:[%s3 + $0xa0] sm:$0xff]
  %v234 = vld [vmem:[%s3 + $0xa8] sm:$0xff]
  %v235 = vld [vmem:[%s3 + $0xb0] sm:$0xff]
  %v236 = vld [vmem:[%s3 + $0xb8] sm:$0xff]
  %v237 = vld [vmem:[%s3 + $0xc0] sm:$0xff]
  %v238 = vld [vmem:[%s3 + $0xc8] sm:$0xff]
  %v239 = vld [vmem:[%s3 + $0xd0] sm:$0xff]
  %v240 = vld [vmem:[%s3 + $0xd8] sm:$0xff]
  %v241 = vld [vmem:[%s3 + $0xe0] sm:$0xff]
  %v242 = vld [vmem:[%s3 + $0xe8] sm:$0xff]
  %v243 = vld [vmem:[%s3 + $0xf0] sm:$0xff]
  %v244 = vld [vmem:[%s3 + $0xf8] sm:$0xff]
  %v245 = vld [vmem:[%s4] sm:$0x3]
  %v247 = vlaneseq
  %v248 = vshrl.u32 %v247, 7
  %v249 = vsub.s32 0, %v248
  %v250 = vrot.slane %v245, %v249
  %v251 = vlaneseq
  %v252 = vshrl.u32 %v251, 7
  %v253 = vsub.s32 1, %v252
  %v254 = vrot.slane %v245, %v253
  %v289 = vunpack.c.l.b16 %v213
  %v290 = vunpack.c.h.b16 %v213
  %v291 = vunpack.c.l.b16 %v214
  %v292 = vunpack.c.h.b16 %v214
  %v293 = vunpack.c.l.b16 %v215
  %v294 = vunpack.c.h.b16 %v215
  %v295 = vunpack.c.l.b16 %v216
  %v296 = vunpack.c.h.b16 %v216
  %v297 = vunpack.c.l.b16 %v217
  %v298 = vunpack.c.h.b16 %v217
  %v299 = vunpack.c.l.b16 %v218
  %v300 = vunpack.c.h.b16 %v218
  %v301 = vunpack.c.l.b16 %v219
  %v302 = vunpack.c.h.b16 %v219
  %v303 = vunpack.c.l.b16 %v220
  %v304 = vunpack.c.h.b16 %v220
  %v305 = vunpack.c.l.b16 %v221
  %v306 = vunpack.c.h.b16 %v221
  %v307 = vunpack.c.l.b16 %v222
  %v308 = vunpack.c.h.b16 %v222
  %v309 = vunpack.c.l.b16 %v223
  %v310 = vunpack.c.h.b16 %v223
  %v311 = vunpack.c.l.b16 %v224
  %v312 = vunpack.c.h.b16 %v224
  %v313 = vunpack.c.l.b16 %v225
  %v314 = vunpack.c.h.b16 %v225
  %v315 = vunpack.c.l.b16 %v226
  %v316 = vunpack.c.h.b16 %v226
  %v317 = vunpack.c.l.b16 %v227
  %v318 = vunpack.c.h.b16 %v227
  %v319 = vunpack.c.l.b16 %v228
  %v320 = vunpack.c.h.b16 %v228
  %v321 = vunpack.c.l.b16 %v229
  %v322 = vunpack.c.h.b16 %v229
  %v323 = vunpack.c.l.b16 %v230
  %v324 = vunpack.c.h.b16 %v230
  %v325 = vunpack.c.l.b16 %v231
  %v326 = vunpack.c.h.b16 %v231
  %v327 = vunpack.c.l.b16 %v232
  %v328 = vunpack.c.h.b16 %v232
  %v329 = vunpack.c.l.b16 %v233
  %v330 = vunpack.c.h.b16 %v233
  %v331 = vunpack.c.l.b16 %v234
  %v332 = vunpack.c.h.b16 %v234
  %v333 = vunpack.c.l.b16 %v235
  %v334 = vunpack.c.h.b16 %v235
  %v335 = vunpack.c.l.b16 %v236
  %v336 = vunpack.c.h.b16 %v236
  %v337 = vunpack.c.l.b16 %v237
  %v338 = vunpack.c.h.b16 %v237
  %v339 = vunpack.c.l.b16 %v238
  %v340 = vunpack.c.h.b16 %v238
  %v341 = vunpack.c.l.b16 %v239
  %v342 = vunpack.c.h.b16 %v239
  %v343 = vunpack.c.l.b16 %v240
  %v344 = vunpack.c.h.b16 %v240
  %v345 = vunpack.c.l.b16 %v241
  %v346 = vunpack.c.h.b16 %v241
  %v347 = vunpack.c.l.b16 %v242
  %v348 = vunpack.c.h.b16 %v242
  %v349 = vunpack.c.l.b16 %v243
  %v350 = vunpack.c.h.b16 %v243
  %v351 = vunpack.c.l.b16 %v244
  %v352 = vunpack.c.h.b16 %v244
  %v353 = vpack.c.b16 %v291, %v289
  %v354 = vpack.c.b16 %v292, %v290
  %v355 = vpack.c.b16 %v295, %v293
  %v356 = vpack.c.b16 %v296, %v294
  %v357 = vpack.c.b16 %v299, %v297
  %v358 = vpack.c.b16 %v300, %v298
  %v359 = vpack.c.b16 %v303, %v301
  %v360 = vpack.c.b16 %v304, %v302
  %v361 = vpack.c.b16 %v307, %v305
  %v362 = vpack.c.b16 %v308, %v306
  %v363 = vpack.c.b16 %v311, %v309
  %v364 = vpack.c.b16 %v312, %v310
  %v365 = vpack.c.b16 %v315, %v313
  %v366 = vpack.c.b16 %v316, %v314
  %v367 = vpack.c.b16 %v319, %v317
  %v368 = vpack.c.b16 %v320, %v318
  %v369 = vpack.c.b16 %v323, %v321
  %v370 = vpack.c.b16 %v324, %v322
  %v371 = vpack.c.b16 %v327, %v325
  %v372 = vpack.c.b16 %v328, %v326
  %v373 = vpack.c.b16 %v331, %v329
  %v374 = vpack.c.b16 %v332, %v330
  %v375 = vpack.c.b16 %v335, %v333
  %v376 = vpack.c.b16 %v336, %v334
  %v377 = vpack.c.b16 %v339, %v337
  %v378 = vpack.c.b16 %v340, %v338
  %v379 = vpack.c.b16 %v343, %v341
  %v380 = vpack.c.b16 %v344, %v342
  %v381 = vpack.c.b16 %v347, %v345
  %v382 = vpack.c.b16 %v348, %v346
  %v383 = vpack.c.b16 %v351, %v349
  %v384 = vpack.c.b16 %v352, %v350
  %417 = vmatprep.subr.bf16.mxu0 %v354
  %418 = vmatpush1.bf16.msra.mxu0 %v353
  %419 = vmatprep.subr.bf16.mxu0 %v356
  %420 = vmatpush1.bf16.msra.mxu0 %v355
  %421 = vmatprep.subr.bf16.mxu0 %v358
  %422 = vmatpush1.bf16.msra.mxu0 %v357
  %423 = vmatprep.subr.bf16.mxu0 %v360
  %424 = vmatpush1.bf16.msra.mxu0 %v359
  %425 = vmatprep.subr.bf16.mxu0 %v362
  %426 = vmatpush1.bf16.msra.mxu0 %v361
  %427 = vmatprep.subr.bf16.mxu0 %v364
  %428 = vmatpush1.bf16.msra.mxu0 %v363
  %429 = vmatprep.subr.bf16.mxu0 %v366
  %430 = vmatpush1.bf16.msra.mxu0 %v365
  %431 = vmatprep.subr.bf16.mxu0 %v368
  %432 = vmatpush1.bf16.msra.mxu0 %v367
  %433 = vmatprep.subr.bf16.mxu0 %v370
  %434 = vmatpush1.bf16.msra.mxu0 %v369
  %435 = vmatprep.subr.bf16.mxu0 %v372
  %436 = vmatpush1.bf16.msra.mxu0 %v371
  %437 = vmatprep.subr.bf16.mxu0 %v374
  %438 = vmatpush1.bf16.msra.mxu0 %v373
  %439 = vmatprep.subr.bf16.mxu0 %v376
  %440 = vmatpush1.bf16.msra.mxu0 %v375
  %441 = vmatprep.subr.bf16.mxu0 %v378
  %442 = vmatpush1.bf16.msra.mxu0 %v377
  %443 = vmatprep.subr.bf16.mxu0 %v380
  %444 = vmatpush1.bf16.msra.mxu0 %v379
  %445 = vmatprep.subr.bf16.mxu0 %v382
  %446 = vmatpush1.bf16.msra.mxu0 %v381
  %447 = vmatprep.subr.bf16.mxu0 %v384
  %448 = vmatpush1.bf16.msra.mxu0 %v383
  %449 = vmatprep.mubr.bf16.mxu0 %v210
  %450 = vmatmul.mubr.bf16.gmra.mrb[0].mxu0 %v209
  %v451 = vpop.f32.mrb[0].mxu0
  %v452 = vadd.f32 %v250, %v451
  %v453 = vpop.f32.mrb[0].mxu0
  %v454 = vadd.f32 %v254, %v453
  %v455 = vpop.f32.mrb[0].mxu0
  %v456 = vadd.f32 %v250, %v455
  %v457 = vpop.f32.mrb[0].mxu0
  %v458 = vadd.f32 %v254, %v457
  %459 = vdwg.mxu0
  %v460 = vld [vmem:[%s5] sm:$0xff]
  %v461 = vld [vmem:[%s5 + $0x8] sm:$0xff]
  %v462 = vld [vmem:[%s5 + $0x10] sm:$0xff]
  %v463 = vld [vmem:[%s5 + $0x18] sm:$0xff]
  %v464 = vld [vmem:[%s5 + $0x20] sm:$0xff]
  %v465 = vld [vmem:[%s5 + $0x28] sm:$0xff]
  %v466 = vld [vmem:[%s5 + $0x30] sm:$0xff]
  %v467 = vld [vmem:[%s5 + $0x38] sm:$0xff]
  %v468 = vld [vmem:[%s5 + $0x40] sm:$0xff]
  %v469 = vld [vmem:[%s5 + $0x48] sm:$0xff]
  %v470 = vld [vmem:[%s5 + $0x50] sm:$0xff]
  %v471 = vld [vmem:[%s5 + $0x58] sm:$0xff]
  %v472 = vld [vmem:[%s5 + $0x60] sm:$0xff]
  %v473 = vld [vmem:[%s5 + $0x68] sm:$0xff]
  %v474 = vld [vmem:[%s5 + $0x70] sm:$0xff]
  %v475 = vld [vmem:[%s5 + $0x78] sm:$0xff]
  %v476 = vld [vmem:[%s5 + $0x80] sm:$0xff]
  %v477 = vld [vmem:[%s5 + $0x88] sm:$0xff]
  %v478 = vld [vmem:[%s5 + $0x90] sm:$0xff]
  %v479 = vld [vmem:[%s5 + $0x98] sm:$0xff]
  %v480 = vld [vmem:[%s5 + $0xa0] sm:$0xff]
  %v481 = vld [vmem:[%s5 + $0xa8] sm:$0xff]
  %v482 = vld [vmem:[%s5 + $0xb0] sm:$0xff]
  %v483 = vld [vmem:[%s5 + $0xb8] sm:$0xff]
  %v484 = vld [vmem:[%s5 + $0xc0] sm:$0xff]
  %v485 = vld [vmem:[%s5 + $0xc8] sm:$0xff]
  %v486 = vld [vmem:[%s5 + $0xd0] sm:$0xff]
  %v487 = vld [vmem:[%s5 + $0xd8] sm:$0xff]
  %v488 = vld [vmem:[%s5 + $0xe0] sm:$0xff]
  %v489 = vld [vmem:[%s5 + $0xe8] sm:$0xff]
  %v490 = vld [vmem:[%s5 + $0xf0] sm:$0xff]
  %v491 = vld [vmem:[%s5 + $0xf8] sm:$0xff]
  %v492 = vld [vmem:[%s6] sm:$0x3]
  %v494 = vlaneseq
  %v495 = vshrl.u32 %v494, 7
  %v496 = vsub.s32 0, %v495
  %v497 = vrot.slane %v492, %v496
  %v498 = vlaneseq
  %v499 = vshrl.u32 %v498, 7
  %v500 = vsub.s32 1, %v499
  %v501 = vrot.slane %v492, %v500
  %v536 = vunpack.c.l.b16 %v460
  %v537 = vunpack.c.h.b16 %v460
  %v538 = vunpack.c.l.b16 %v461
  %v539 = vunpack.c.h.b16 %v461
  %v540 = vunpack.c.l.b16 %v462
  %v541 = vunpack.c.h.b16 %v462
  %v542 = vunpack.c.l.b16 %v463
  %v543 = vunpack.c.h.b16 %v463
  %v544 = vunpack.c.l.b16 %v464
  %v545 = vunpack.c.h.b16 %v464
  %v546 = vunpack.c.l.b16 %v465
  %v547 = vunpack.c.h.b16 %v465
  %v548 = vunpack.c.l.b16 %v466
  %v549 = vunpack.c.h.b16 %v466
  %v550 = vunpack.c.l.b16 %v467
  %v551 = vunpack.c.h.b16 %v467
  %v552 = vunpack.c.l.b16 %v468
  %v553 = vunpack.c.h.b16 %v468
  %v554 = vunpack.c.l.b16 %v469
  %v555 = vunpack.c.h.b16 %v469
  %v556 = vunpack.c.l.b16 %v470
  %v557 = vunpack.c.h.b16 %v470
  %v558 = vunpack.c.l.b16 %v471
  %v559 = vunpack.c.h.b16 %v471
  %v560 = vunpack.c.l.b16 %v472
  %v561 = vunpack.c.h.b16 %v472
  %v562 = vunpack.c.l.b16 %v473
  %v563 = vunpack.c.h.b16 %v473
  %v564 = vunpack.c.l.b16 %v474
  %v565 = vunpack.c.h.b16 %v474
  %v566 = vunpack.c.l.b16 %v475
  %v567 = vunpack.c.h.b16 %v475
  %v568 = vunpack.c.l.b16 %v476
  %v569 = vunpack.c.h.b16 %v476
  %v570 = vunpack.c.l.b16 %v477
  %v571 = vunpack.c.h.b16 %v477
  %v572 = vunpack.c.l.b16 %v478
  %v573 = vunpack.c.h.b16 %v478
  %v574 = vunpack.c.l.b16 %v479
  %v575 = vunpack.c.h.b16 %v479
  %v576 = vunpack.c.l.b16 %v480
  %v577 = vunpack.c.h.b16 %v480
  %v578 = vunpack.c.l.b16 %v481
  %v579 = vunpack.c.h.b16 %v481
  %v580 = vunpack.c.l.b16 %v482
  %v581 = vunpack.c.h.b16 %v482
  %v582 = vunpack.c.l.b16 %v483
  %v583 = vunpack.c.h.b16 %v483
  %v584 = vunpack.c.l.b16 %v484
  %v585 = vunpack.c.h.b16 %v484
  %v586 = vunpack.c.l.b16 %v485
  %v587 = vunpack.c.h.b16 %v485
  %v588 = vunpack.c.l.b16 %v486
  %v589 = vunpack.c.h.b16 %v486
  %v590 = vunpack.c.l.b16 %v487
  %v591 = vunpack.c.h.b16 %v487
  %v592 = vunpack.c.l.b16 %v488
  %v593 = vunpack.c.h.b16 %v488
  %v594 = vunpack.c.l.b16 %v489
  %v595 = vunpack.c.h.b16 %v489
  %v596 = vunpack.c.l.b16 %v490
  %v597 = vunpack.c.h.b16 %v490
  %v598 = vunpack.c.l.b16 %v491
  %v599 = vunpack.c.h.b16 %v491
  %v600 = vpack.c.b16 %v538, %v536
  %v601 = vpack.c.b16 %v539, %v537
  %v602 = vpack.c.b16 %v542, %v540
  %v603 = vpack.c.b16 %v543, %v541
  %v604 = vpack.c.b16 %v546, %v544
  %v605 = vpack.c.b16 %v547, %v545
  %v606 = vpack.c.b16 %v550, %v548
  %v607 = vpack.c.b16 %v551, %v549
  %v608 = vpack.c.b16 %v554, %v552
  %v609 = vpack.c.b16 %v555, %v553
  %v610 = vpack.c.b16 %v558, %v556
  %v611 = vpack.c.b16 %v559, %v557
  %v612 = vpack.c.b16 %v562, %v560
  %v613 = vpack.c.b16 %v563, %v561
  %v614 = vpack.c.b16 %v566, %v564
  %v615 = vpack.c.b16 %v567, %v565
  %v616 = vpack.c.b16 %v570, %v568
  %v617 = vpack.c.b16 %v571, %v569
  %v618 = vpack.c.b16 %v574, %v572
  %v619 = vpack.c.b16 %v575, %v573
  %v620 = vpack.c.b16 %v578, %v576
  %v621 = vpack.c.b16 %v579, %v577
  %v622 = vpack.c.b16 %v582, %v580
  %v623 = vpack.c.b16 %v583, %v581
  %v624 = vpack.c.b16 %v586, %v584
  %v625 = vpack.c.b16 %v587, %v585
  %v626 = vpack.c.b16 %v590, %v588
  %v627 = vpack.c.b16 %v591, %v589
  %v628 = vpack.c.b16 %v594, %v592
  %v629 = vpack.c.b16 %v595, %v593
  %v630 = vpack.c.b16 %v598, %v596
  %v631 = vpack.c.b16 %v599, %v597
  %664 = vmatprep.subr.bf16.mxu0 %v601
  %665 = vmatpush1.bf16.msra.mxu0 %v600
  %666 = vmatprep.subr.bf16.mxu0 %v603
  %667 = vmatpush1.bf16.msra.mxu0 %v602
  %668 = vmatprep.subr.bf16.mxu0 %v605
  %669 = vmatpush1.bf16.msra.mxu0 %v604
  %670 = vmatprep.subr.bf16.mxu0 %v607
  %671 = vmatpush1.bf16.msra.mxu0 %v606
  %672 = vmatprep.subr.bf16.mxu0 %v609
  %673 = vmatpush1.bf16.msra.mxu0 %v608
  %674 = vmatprep.subr.bf16.mxu0 %v611
  %675 = vmatpush1.bf16.msra.mxu0 %v610
  %676 = vmatprep.subr.bf16.mxu0 %v613
  %677 = vmatpush1.bf16.msra.mxu0 %v612
  %678 = vmatprep.subr.bf16.mxu0 %v615
  %679 = vmatpush1.bf16.msra.mxu0 %v614
  %680 = vmatprep.subr.bf16.mxu0 %v617
  %681 = vmatpush1.bf16.msra.mxu0 %v616
  %682 = vmatprep.subr.bf16.mxu0 %v619
  %683 = vmatpush1.bf16.msra.mxu0 %v618
  %684 = vmatprep.subr.bf16.mxu0 %v621
  %685 = vmatpush1.bf16.msra.mxu0 %v620
  %686 = vmatprep.subr.bf16.mxu0 %v623
  %687 = vmatpush1.bf16.msra.mxu0 %v622
  %688 = vmatprep.subr.bf16.mxu0 %v625
  %689 = vmatpush1.bf16.msra.mxu0 %v624
  %690 = vmatprep.subr.bf16.mxu0 %v627
  %691 = vmatpush1.bf16.msra.mxu0 %v626
  %692 = vmatprep.subr.bf16.mxu0 %v629
  %693 = vmatpush1.bf16.msra.mxu0 %v628
  %694 = vmatprep.subr.bf16.mxu0 %v631
  %695 = vmatpush1.bf16.msra.mxu0 %v630
  %696 = vmatprep.mubr.bf16.mxu0 %v212
  %697 = vmatmul.mubr.bf16.gmra.mrb[0].mxu0 %v211
  %v698 = vpop.f32.mrb[0].mxu0
  %v699 = vadd.f32 %v497, %v698
  %v700 = vpop.f32.mrb[0].mxu0
  %v701 = vadd.f32 %v501, %v700
  %v702 = vpop.f32.mrb[0].mxu0
  %v703 = vadd.f32 %v497, %v702
  %v704 = vpop.f32.mrb[0].mxu0
  %v705 = vadd.f32 %v501, %v704
  %706 = vdwg.mxu0
  %v707 = vmax.f32 %v452, 0.0
  %v708 = vmax.f32 %v454, 0.0
  %v709 = vmax.f32 %v456, 0.0
  %v710 = vmax.f32 %v458, 0.0
  %v711 = vpack.c.bf16 %v709, %v707
  %v712 = vpack.c.bf16 %v710, %v708
  %v713 = vmax.f32 %v699, 0.0
  %v714 = vmax.f32 %v701, 0.0
  %v715 = vmax.f32 %v703, 0.0
  %v716 = vmax.f32 %v705, 0.0
  %v717 = vpack.c.bf16 %v715, %v713
  %v718 = vpack.c.bf16 %v716, %v714
  %v719 = vld [vmem:[%s7] sm:$0xf]
  %v720 = vld [vmem:[%s7 + $0x4] sm:$0xf]
  %v721 = vld [vmem:[%s7 + $0x8] sm:$0xf]
  %v722 = vld [vmem:[%s7 + $0xc] sm:$0xf]
  %v723 = vld [vmem:[%s7 + $0x10] sm:$0xf]
  %v724 = vld [vmem:[%s7 + $0x14] sm:$0xf]
  %v725 = vld [vmem:[%s7 + $0x18] sm:$0xf]
  %v726 = vld [vmem:[%s7 + $0x1c] sm:$0xf]
  %v727 = vld [vmem:[%s7 + $0x20] sm:$0xf]
  %v728 = vld [vmem:[%s7 + $0x24] sm:$0xf]
  %v729 = vld [vmem:[%s7 + $0x28] sm:$0xf]
  %v730 = vld [vmem:[%s7 + $0x2c] sm:$0xf]
  %v731 = vld [vmem:[%s7 + $0x30] sm:$0xf]
  %v732 = vld [vmem:[%s7 + $0x34] sm:$0xf]
  %v733 = vld [vmem:[%s7 + $0x38] sm:$0xf]
  %v734 = vld [vmem:[%s7 + $0x3c] sm:$0xf]
  %v735 = vld [vmem:[%s7 + $0x40] sm:$0xf]
  %v736 = vld [vmem:[%s7 + $0x44] sm:$0xf]
  %v737 = vld [vmem:[%s7 + $0x48] sm:$0xf]
  %v738 = vld [vmem:[%s7 + $0x4c] sm:$0xf]
  %v739 = vld [vmem:[%s7 + $0x50] sm:$0xf]
  %v740 = vld [vmem:[%s7 + $0x54] sm:$0xf]
  %v741 = vld [vmem:[%s7 + $0x58] sm:$0xf]
  %v742 = vld [vmem:[%s7 + $0x5c] sm:$0xf]
  %v743 = vld [vmem:[%s7 + $0x60] sm:$0xf]
  %v744 = vld [vmem:[%s7 + $0x64] sm:$0xf]
  %v745 = vld [vmem:[%s7 + $0x68] sm:$0xf]
  %v746 = vld [vmem:[%s7 + $0x6c] sm:$0xf]
  %v747 = vld [vmem:[%s7 + $0x70] sm:$0xf]
  %v748 = vld [vmem:[%s7 + $0x74] sm:$0xf]
  %v749 = vld [vmem:[%s7 + $0x78] sm:$0xf]
  %v750 = vld [vmem:[%s7 + $0x7c] sm:$0xf]
  %v751 = vld [vmem:[%s7 + $0x80] sm:$0xf]
  %v752 = vld [vmem:[%s7 + $0x84] sm:$0xf]
  %v753 = vld [vmem:[%s7 + $0x88] sm:$0xf]
  %v754 = vld [vmem:[%s7 + $0x8c] sm:$0xf]
  %v755 = vld [vmem:[%s7 + $0x90] sm:$0xf]
  %v756 = vld [vmem:[%s7 + $0x94] sm:$0xf]
  %v757 = vld [vmem:[%s7 + $0x98] sm:$0xf]
  %v758 = vld [vmem:[%s7 + $0x9c] sm:$0xf]
  %v759 = vld [vmem:[%s7 + $0xa0] sm:$0xf]
  %v760 = vld [vmem:[%s7 + $0xa4] sm:$0xf]
  %v761 = vld [vmem:[%s7 + $0xa8] sm:$0xf]
  %v762 = vld [vmem:[%s7 + $0xac] sm:$0xf]
  %v763 = vld [vmem:[%s7 + $0xb0] sm:$0xf]
  %v764 = vld [vmem:[%s7 + $0xb4] sm:$0xf]
  %v765 = vld [vmem:[%s7 + $0xb8] sm:$0xf]
  %v766 = vld [vmem:[%s7 + $0xbc] sm:$0xf]
  %v767 = vld [vmem:[%s7 + $0xc0] sm:$0xf]
  %v768 = vld [vmem:[%s7 + $0xc4] sm:$0xf]
  %v769 = vld [vmem:[%s7 + $0xc8] sm:$0xf]
  %v770 = vld [vmem:[%s7 + $0xcc] sm:$0xf]
  %v771 = vld [vmem:[%s7 + $0xd0] sm:$0xf]
  %v772 = vld [vmem:[%s7 + $0xd4] sm:$0xf]
  %v773 = vld [vmem:[%s7 + $0xd8] sm:$0xf]
  %v774 = vld [vmem:[%s7 + $0xdc] sm:$0xf]
  %v775 = vld [vmem:[%s7 + $0xe0] sm:$0xf]
  %v776 = vld [vmem:[%s7 + $0xe4] sm:$0xf]
  %v777 = vld [vmem:[%s7 + $0xe8] sm:$0xf]
  %v778 = vld [vmem:[%s7 + $0xec] sm:$0xf]
  %v779 = vld [vmem:[%s7 + $0xf0] sm:$0xf]
  %v780 = vld [vmem:[%s7 + $0xf4] sm:$0xf]
  %v781 = vld [vmem:[%s7 + $0xf8] sm:$0xf]
  %v782 = vld [vmem:[%s7 + $0xfc] sm:$0xf]
  %v783 = vld [vmem:[%s8] sm:$0x1]
  %v785 = vlaneseq
  %v786 = vshrl.u32 %v785, 7
  %v787 = vsub.s32 0, %v786
  %v788 = vrot.slane %v783, %v787
  %v854 = vunpack.c.l.b16 %v719
  %v855 = vunpack.c.l.b16 %v720
  %v856 = vunpack.c.l.b16 %v721
  %v857 = vunpack.c.l.b16 %v722
  %v858 = vunpack.c.l.b16 %v723
  %v859 = vunpack.c.l.b16 %v724
  %v860 = vunpack.c.l.b16 %v725
  %v861 = vunpack.c.l.b16 %v726
  %v862 = vunpack.c.l.b16 %v727
  %v863 = vunpack.c.l.b16 %v728
  %v864 = vunpack.c.l.b16 %v729
  %v865 = vunpack.c.l.b16 %v730
  %v866 = vunpack.c.l.b16 %v731
  %v867 = vunpack.c.l.b16 %v732
  %v868 = vunpack.c.l.b16 %v733
  %v869 = vunpack.c.l.b16 %v734
  %v870 = vunpack.c.l.b16 %v735
  %v871 = vunpack.c.l.b16 %v736
  %v872 = vunpack.c.l.b16 %v737
  %v873 = vunpack.c.l.b16 %v738
  %v874 = vunpack.c.l.b16 %v739
  %v875 = vunpack.c.l.b16 %v740
  %v876 = vunpack.c.l.b16 %v741
  %v877 = vunpack.c.l.b16 %v742
  %v878 = vunpack.c.l.b16 %v743
  %v879 = vunpack.c.l.b16 %v744
  %v880 = vunpack.c.l.b16 %v745
  %v881 = vunpack.c.l.b16 %v746
  %v882 = vunpack.c.l.b16 %v747
  %v883 = vunpack.c.l.b16 %v748
  %v884 = vunpack.c.l.b16 %v749
  %v885 = vunpack.c.l.b16 %v750
  %v886 = vunpack.c.l.b16 %v751
  %v887 = vunpack.c.l.b16 %v752
  %v888 = vunpack.c.l.b16 %v753
  %v889 = vunpack.c.l.b16 %v754
  %v890 = vunpack.c.l.b16 %v755
  %v891 = vunpack.c.l.b16 %v756
  %v892 = vunpack.c.l.b16 %v757
  %v893 = vunpack.c.l.b16 %v758
  %v894 = vunpack.c.l.b16 %v759
  %v895 = vunpack.c.l.b16 %v760
  %v896 = vunpack.c.l.b16 %v761
  %v897 = vunpack.c.l.b16 %v762
  %v898 = vunpack.c.l.b16 %v763
  %v899 = vunpack.c.l.b16 %v764
  %v900 = vunpack.c.l.b16 %v765
  %v901 = vunpack.c.l.b16 %v766
  %v902 = vunpack.c.l.b16 %v767
  %v903 = vunpack.c.l.b16 %v768
  %v904 = vunpack.c.l.b16 %v769
  %v905 = vunpack.c.l.b16 %v770
  %v906 = vunpack.c.l.b16 %v771
  %v907 = vunpack.c.l.b16 %v772
  %v908 = vunpack.c.l.b16 %v773
  %v909 = vunpack.c.l.b16 %v774
  %v910 = vunpack.c.l.b16 %v775
  %v911 = vunpack.c.l.b16 %v776
  %v912 = vunpack.c.l.b16 %v777
  %v913 = vunpack.c.l.b16 %v778
  %v914 = vunpack.c.l.b16 %v779
  %v915 = vunpack.c.l.b16 %v780
  %v916 = vunpack.c.l.b16 %v781
  %v917 = vunpack.c.l.b16 %v782
  %v918 = vpack.c.b16 %v855, %v854
  %v919 = vpack.c.b16 %v857, %v856
  %v920 = vpack.c.b16 %v859, %v858
  %v921 = vpack.c.b16 %v861, %v860
  %v922 = vpack.c.b16 %v863, %v862
  %v923 = vpack.c.b16 %v865, %v864
  %v924 = vpack.c.b16 %v867, %v866
  %v925 = vpack.c.b16 %v869, %v868
  %v926 = vpack.c.b16 %v871, %v870
  %v927 = vpack.c.b16 %v873, %v872
  %v928 = vpack.c.b16 %v875, %v874
  %v929 = vpack.c.b16 %v877, %v876
  %v930 = vpack.c.b16 %v879, %v878
  %v931 = vpack.c.b16 %v881, %v880
  %v932 = vpack.c.b16 %v883, %v882
  %v933 = vpack.c.b16 %v885, %v884
  %v934 = vpack.c.b16 %v887, %v886
  %v935 = vpack.c.b16 %v889, %v888
  %v936 = vpack.c.b16 %v891, %v890
  %v937 = vpack.c.b16 %v893, %v892
  %v938 = vpack.c.b16 %v895, %v894
  %v939 = vpack.c.b16 %v897, %v896
  %v940 = vpack.c.b16 %v899, %v898
  %v941 = vpack.c.b16 %v901, %v900
  %v942 = vpack.c.b16 %v903, %v902
  %v943 = vpack.c.b16 %v905, %v904
  %v944 = vpack.c.b16 %v907, %v906
  %v945 = vpack.c.b16 %v909, %v908
  %v946 = vpack.c.b16 %v911, %v910
  %v947 = vpack.c.b16 %v913, %v912
  %v948 = vpack.c.b16 %v915, %v914
  %v949 = vpack.c.b16 %v917, %v916
  %982 = vmatprep.subr.bf16.mxu0 0
  %983 = vmatpush1.bf16.msra.mxu0 %v918
  %984 = vmatprep.subr.bf16.mxu0 0
  %985 = vmatpush1.bf16.msra.mxu0 %v919
  %986 = vmatprep.subr.bf16.mxu0 0
  %987 = vmatpush1.bf16.msra.mxu0 %v920
  %988 = vmatprep.subr.bf16.mxu0 0
  %989 = vmatpush1.bf16.msra.mxu0 %v921
  %990 = vmatprep.subr.bf16.mxu0 0
  %991 = vmatpush1.bf16.msra.mxu0 %v922
  %992 = vmatprep.subr.bf16.mxu0 0
  %993 = vmatpush1.bf16.msra.mxu0 %v923
  %994 = vmatprep.subr.bf16.mxu0 0
  %995 = vmatpush1.bf16.msra.mxu0 %v924
  %996 = vmatprep.subr.bf16.mxu0 0
  %997 = vmatpush1.bf16.msra.mxu0 %v925
  %998 = vmatprep.subr.bf16.mxu0 0
  %999 = vmatpush1.bf16.msra.mxu0 %v926
  %1000 = vmatprep.subr.bf16.mxu0 0
  %1001 = vmatpush1.bf16.msra.mxu0 %v927
  %1002 = vmatprep.subr.bf16.mxu0 0
  %1003 = vmatpush1.bf16.msra.mxu0 %v928
  %1004 = vmatprep.subr.bf16.mxu0 0
  %1005 = vmatpush1.bf16.msra.mxu0 %v929
  %1006 = vmatprep.subr.bf16.mxu0 0
  %1007 = vmatpush1.bf16.msra.mxu0 %v930
  %1008 = vmatprep.subr.bf16.mxu0 0
  %1009 = vmatpush1.bf16.msra.mxu0 %v931
  %1010 = vmatprep.subr.bf16.mxu0 0
  %1011 = vmatpush1.bf16.msra.mxu0 %v932
  %1012 = vmatprep.subr.bf16.mxu0 0
  %1013 = vmatpush1.bf16.msra.mxu0 %v933
  %1014 = vmatprep.mubr.bf16.mxu0 %v712
  %1015 = vmatmul.mubr.bf16.gmra.mrb[0].mxu0 %v711
  %v1016 = vpop.f32.mrb[0].mxu0
  %v1017 = vadd.f32 %v788, %v1016
  %v1018 = vpop.f32.mrb[0].mxu0
  %v1019 = vpop.f32.mrb[0].mxu0
  %v1020 = vadd.f32 %v788, %v1019
  %v1021 = vpop.f32.mrb[0].mxu0
  %1022 = vdwg.mxu0
  %1023 = vmatprep.subr.bf16.mxu0 0
  %1024 = vmatpush1.bf16.msra.mxu0 %v934
  %1025 = vmatprep.subr.bf16.mxu0 0
  %1026 = vmatpush1.bf16.msra.mxu0 %v935
  %1027 = vmatprep.subr.bf16.mxu0 0
  %1028 = vmatpush1.bf16.msra.mxu0 %v936
  %1029 = vmatprep.subr.bf16.mxu0 0
  %1030 = vmatpush1.bf16.msra.mxu0 %v937
  %1031 = vmatprep.subr.bf16.mxu0 0
  %1032 = vmatpush1.bf16.msra.mxu0 %v938
  %1033 = vmatprep.subr.bf16.mxu0 0
  %1034 = vmatpush1.bf16.msra.mxu0 %v939
  %1035 = vmatprep.subr.bf16.mxu0 0
  %1036 = vmatpush1.bf16.msra.mxu0 %v940
  %1037 = vmatprep.subr.bf16.mxu0 0
  %1038 = vmatpush1.bf16.msra.mxu0 %v941
  %1039 = vmatprep.subr.bf16.mxu0 0
  %1040 = vmatpush1.bf16.msra.mxu0 %v942
  %1041 = vmatprep.subr.bf16.mxu0 0
  %1042 = vmatpush1.bf16.msra.mxu0 %v943
  %1043 = vmatprep.subr.bf16.mxu0 0
  %1044 = vmatpush1.bf16.msra.mxu0 %v944
  %1045 = vmatprep.subr.bf16.mxu0 0
  %1046 = vmatpush1.bf16.msra.mxu0 %v945
  %1047 = vmatprep.subr.bf16.mxu0 0
  %1048 = vmatpush1.bf16.msra.mxu0 %v946
  %1049 = vmatprep.subr.bf16.mxu0 0
  %1050 = vmatpush1.bf16.msra.mxu0 %v947
  %1051 = vmatprep.subr.bf16.mxu0 0
  %1052 = vmatpush1.bf16.msra.mxu0 %v948
  %1053 = vmatprep.subr.bf16.mxu0 0
  %1054 = vmatpush1.bf16.msra.mxu0 %v949
  %1055 = vmatprep.mubr.bf16.mxu0 %v718
  %1056 = vmatmul.mubr.bf16.gmra.mrb[0].mxu0 %v717
  %v1057 = vpop.f32.mrb[0].mxu0
  %v1058 = vadd.f32 %v1017, %v1057
  %v1059 = vpop.f32.mrb[0].mxu0
  %v1060 = vpop.f32.mrb[0].mxu0
  %v1061 = vadd.f32 %v1020, %v1060
  %v1062 = vpop.f32.mrb[0].mxu0
  %1063 = vdwg.mxu0
  %vm1064 = vcmask 15360
  %1065 = vst.msk [vmem:[%s9] sm:$0xff] %vm1064, %v1058
  %1066 = vst.msk [vmem:[%s9 + $0x8] sm:$0xff] %vm1064, %v1061
  // Predicated region
  $region38: #{critic_forward.1} parent=0 // pred_check
    _
  $region39: #{critic_forward.1} parent=0 // pred_check_branch
    %1068 = sbr.rel (0) target = $region41
  $region40: #{critic_forward.1} parent=0 // pred_region
    _
  $region41: #{critic_forward.1} parent=0 // pred_fallthru
    _
  // Predicated region
  $region42: #{critic_forward.1} parent=0 // pred_check
    _
  $region43: #{critic_forward.1} parent=0 // pred_check_branch
    %1070 = sbr.rel (0) target = $region45
  $region44: #{critic_forward.1} parent=0 // pred_region
    _
  $region45: #{critic_forward.1} parent=0 // pred_fallthru
    _

</llo_original>
